<compile_context>
chip_gen: v5e
topology: v5e:2x2
jax: 0.10.0
libtpu: 0.0.40
codegen_flags: <defaults>
</compile_context>

<pallas_src>
import functools
import math

import jax
import jax.numpy as jnp
from jax.experimental import pallas as pl
from jax.experimental.pallas import tpu as pltpu

_OUT_LANES = 128  # lane-dense per-row output slab -> unmasked vector stores


# ----------------------------------------------------------------------------------
# Generation detection (tile / VMEM budgets differ across v5e / v6e / v7x).
# ----------------------------------------------------------------------------------
def _device_kind() -> str:
    try:
        return jax.devices()[0].device_kind.lower()
    except Exception:
        return ""


def _vmem_limit_bytes(kind: str) -> int:
    if "v7" in kind or "tpu7" in kind:
        return 48 * 1024 * 1024      # v7x: 64 MiB physical per TC -> leave headroom
    if "v5" in kind or "v6" in kind:
        return 96 * 1024 * 1024      # v5e/v5p/v6e: 128 MiB physical VMEM
    return 32 * 1024 * 1024          # unknown: stay at the safe default


def _has_megacore(kind: str) -> bool:
    # chips exposing 2 TensorCores per device: keep >= 2 "parallel" batch tiles there
    return ("v4" in kind) or ("v5p" in kind) or ("v7" in kind) or ("tpu7" in kind)


# ----------------------------------------------------------------------------------
# Path A (default when bsz*(K+1) >= n_data): full-bank MXU matmul, banks read once.
# ----------------------------------------------------------------------------------
def _bank_logits_kernel(f_s_ref, f_t_ref, m1_ref, m2_ref, out_s_ref, out_t_ref,
                        *, inv_t):
    # out_s = (f_s / T) @ memory_v2.T ; out_t = (f_t / T) @ memory_v1.T
    bank_dtype = m1_ref.dtype
    # Fold 1/T into the tiny feature tile (bsz x D); cast to the bank dtype so the
    # MXU runs the native (bf16) path when the banks are bf16 (no-op for f32 banks).
    f_s = (f_s_ref[...].astype(jnp.float32) * inv_t).astype(bank_dtype)
    f_t = (f_t_ref[...].astype(jnp.float32) * inv_t).astype(bank_dtype)
    dn = (((1,), (1,)), ((), ()))            # contract D of both operands (f @ m.T)
    out_s_ref[...] = jax.lax.dot_general(
        f_s, m2_ref[...], dn, preferred_element_type=jnp.float32)
    out_t_ref[...] = jax.lax.dot_general(
        f_t, m1_ref[...], dn, preferred_element_type=jnp.float32)


def _logits_via_bank_matmul(f_s, f_t, memory_v1, memory_v2, inv_t, *,
                            n_tile, vmem_limit):
    bsz, feat_dim = f_s.shape
    n_data = memory_v1.shape[0]

    nt = n_data if n_data <= n_tile else n_tile
    if nt < n_data:
        nt = max(128, (nt // 128) * 128)     # lane-dense output blocks
    nn = pl.cdiv(n_data, nt)

    kernel = functools.partial(_bank_logits_kernel, inv_t=inv_t)
    out_s, out_t = pl.pallas_call(
        kernel,
        out_shape=(jax.ShapeDtypeStruct((bsz, n_data), jnp.float32),
                   jax.ShapeDtypeStruct((bsz, n_data), jnp.float32)),
        grid_spec=pltpu.PrefetchScalarGridSpec(
            num_scalar_prefetch=0,
            grid=(nn,),
            in_specs=[
                pl.BlockSpec((bsz, feat_dim), lambda ni: (0, 0)),   # f_s (resident)
                pl.BlockSpec((bsz, feat_dim), lambda ni: (0, 0)),   # f_t (resident)
                pl.BlockSpec((nt, feat_dim), lambda ni: (ni, 0)),   # memory_v1 tile
                pl.BlockSpec((nt, feat_dim), lambda ni: (ni, 0)),   # memory_v2 tile
            ],
            out_specs=(pl.BlockSpec((bsz, nt), lambda ni: (0, ni)),
                       pl.BlockSpec((bsz, nt), lambda ni: (0, ni))),
        ),
        compiler_params=pltpu.CompilerParams(
            dimension_semantics=("parallel",),       # distinct output columns per step
            vmem_limit_bytes=vmem_limit,
        ),
    )(f_s, f_t, memory_v1, memory_v2)
    return out_s, out_t


# ----------------------------------------------------------------------------------
# Path B (fallback when n_data >> bsz*(K+1)): streaming online-LSE over gathered rows.
# ----------------------------------------------------------------------------------
def _nce_stream_kernel(
    f_s_ref, f_t_ref, w_s_ref, w_t_ref,      # inputs
    out_ref,                                  # (b_tile, 128): per-row ce_s + ce_t
    m_s, l_s, z0_s, m_t, l_t, z0_t,           # VMEM scratch, (b_tile, 1) f32 each
    *, inv_t, k_total, cast_feats):
    ki = pl.program_id(1)
    nk = pl.num_programs(1)
    b_tile, k_tile, _ = w_s_ref.shape
    bank_dtype = w_s_ref.dtype

    # Fold temperature into the small feature tile (b_tile x D) instead of scaling
    # the full (b_tile x k_tile) logits every step.  On v6e/v7x keep the multiply in
    # the bank dtype (bf16 VALU); on v5e (no bf16 VALU) stay in f32.
    f_s = f_s_ref[...].astype(jnp.float32) * inv_t
    f_t = f_t_ref[...].astype(jnp.float32) * inv_t
    if cast_feats:
        f_s = f_s.astype(bank_dtype)
        f_t = f_t.astype(bank_dtype)

    # VPU/XLU score: broadcast f over the (k_tile, D) weight block, elementwise
    # multiply, reduce over D with f32 accumulation (avoids N=1 MXU matvecs).
    logits_s = jnp.sum(w_s_ref[...] * f_s[:, None, :], axis=-1, dtype=jnp.float32)
    logits_t = jnp.sum(w_t_ref[...] * f_t[:, None, :], axis=-1, dtype=jnp.float32)

    @pl.when(ki == 0)
    def _init():
        for m, l in ((m_s, l_s), (m_t, l_t)):
            m[...] = jnp.full_like(m, -jnp.inf)
            l[...] = jnp.zeros_like(l)
        # the positive-class logit (global column 0) lives in the first K tile
        z0_s[...] = logits_s[:, 0:1]
        z0_t[...] = logits_t[:, 0:1]

    def _online_lse(logits, m_ref, l_ref):
        m_prev = m_ref[...]
        m_new = jnp.maximum(m_prev, jnp.max(logits, axis=-1, keepdims=True))
        l_ref[...] = (l_ref[...] * jnp.exp(m_prev - m_new)
                      + jnp.sum(jnp.exp(logits - m_new), axis=-1, keepdims=True))
        m_ref[...] = m_new

    def _update(ls, lt):
        _online_lse(ls, m_s, l_s)
        _online_lse(lt, m_t, l_t)

    if k_total % k_tile != 0:
        # K-tail masking only on the final K tile: the iota/compare/select cost is
        # skipped at runtime on every other step (branch is static: only emitted if
        # a tail actually exists, in which case nk >= 2).
        @pl.when(ki == nk - 1)
        def _tail():
            col = ki * k_tile + jax.lax.broadcasted_iota(
                jnp.int32, (b_tile, k_tile), 1)
            valid = col < k_total
            _update(jnp.where(valid, logits_s, -jnp.inf),
                    jnp.where(valid, logits_t, -jnp.inf))

        @pl.when(ki != nk - 1)
        def _body():
            _update(logits_s, logits_t)
    else:
        _update(logits_s, logits_t)

    @pl.when(ki == nk - 1)
    def _finalize():
        ce_s = m_s[...] + jnp.log(l_s[...]) - z0_s[...]
        ce_t = m_t[...] + jnp.log(l_t[...]) - z0_t[...]
        out_ref[...] = jnp.broadcast_to(ce_s + ce_t, out_ref.shape)


def _loss_via_streaming(f_s, f_t, idx, memory_v1, memory_v2, inv_t, *,
                        k_tile, b_tile, kind, vmem_limit):
    bsz, feat_dim = f_s.shape
    k_total = idx.shape[1]                       # nce_k + 1

    # Glue gather (index_select in torch).  See TODO(synk) at top: per-row DMA fusion
    # only pays for rows >= ~512B; prefer the bank-matmul path when shapes allow.
    w_for_t = jnp.take(memory_v1, idx, axis=0)   # [bsz, K+1, D] -> paired with f_t
    w_for_s = jnp.take(memory_v2, idx, axis=0)   # [bsz, K+1, D] -> paired with f_s

    # Tile choices: sublane-friendly (multiple of 8) or the full dimension.
    # Default k_tile=1024, bt=8, D<=128, f32 banks: 2 streams x 2 buffers x 4 MiB
    # blocks + ~8 MiB of f32 broadcast-product temporaries ~= 24-32 MiB < 48 MiB v7x.
    bt = bsz if bsz <= b_tile else b_tile
    if _has_megacore(kind) and bsz > 8:
        bt = min(bt, max(8, 8 * pl.cdiv(pl.cdiv(bsz, 2), 8)))   # keep nb >= 2
    kt = k_total if k_total <= k_tile else k_tile
    nb = pl.cdiv(bsz, bt)
    nk = pl.cdiv(k_total, kt)

    cast_feats = ("v5e" not in kind) and ("v5 lite" not in kind)
    kernel = functools.partial(_nce_stream_kernel, inv_t=inv_t,
                               k_total=k_total, cast_feats=cast_feats)
    per_row = pl.pallas_call(
        kernel,
        out_shape=jax.ShapeDtypeStruct((nb * bt, _OUT_LANES), jnp.float32),
        grid_spec=pltpu.PrefetchScalarGridSpec(
            num_scalar_prefetch=0,
            grid=(nb, nk),                        # K (reduction) axis last
            in_specs=[
                pl.BlockSpec((bt, feat_dim), lambda bi, ki: (bi, 0)),           # f_s
                pl.BlockSpec((bt, feat_dim), lambda bi, ki: (bi, 0)),           # f_t
                pl.BlockSpec((bt, kt, feat_dim), lambda bi, ki: (bi, ki, 0)),   # w_for_s
                pl.BlockSpec((bt, kt, feat_dim), lambda bi, ki: (bi, ki, 0)),   # w_for_t
            ],
            out_specs=pl.BlockSpec((bt, _OUT_LANES), lambda bi, ki: (bi, 0)),
            scratch_shapes=[pltpu.VMEM((bt, 1), jnp.float32) for _ in range(6)],
        ),
        compiler_params=pltpu.CompilerParams(
            dimension_semantics=("parallel", "arbitrary"),   # batch tiles across TCs
            vmem_limit_bytes=vmem_limit,
        ),
    )(f_s, f_t, w_for_s, w_for_t)

    # Cross-batch-tile sum + mean is tiny; keep it in XLA.  Slice drops padded rows
    # (padded rows may be garbage/NaN -- never reduce over the full padded slab).
    return jnp.sum(per_row[:bsz, 0]) / bsz


# ----------------------------------------------------------------------------------
# Public entry point: pick the regime.
# ----------------------------------------------------------------------------------
def nce_softmax_loss(f_s, f_t, idx, memory_v1, memory_v2, nce_t=0.07, *,
                     k_tile=1024, b_tile=8, n_tile=2048, force_streaming=False):
    """Pallas-backed NCESoftmaxLoss forward. Returns a scalar f32 loss."""
    bsz = f_s.shape[0]
    k_total = idx.shape[1]
    n_data = memory_v1.shape[0]
    inv_t = 1.0 / nce_t
    kind = _device_kind()
    vmem_limit = _vmem_limit_bytes(kind)

    if (not force_streaming) and bsz * k_total >= n_data:
        # Dominant regime: each bank is streamed from HBM exactly once through the
        # MXU (no [bsz, K+1, D] gather round-trip); the tiny [bsz, K+1] logit gather
        # + logsumexp + CE stays in XLA.
        out_s_full, out_t_full = _logits_via_bank_matmul(
            f_s, f_t, memory_v1, memory_v2, inv_t,
            n_tile=n_tile, vmem_limit=vmem_limit)
        logits_s = jnp.take_along_axis(out_s_full, idx, axis=1)   # [bsz, K+1]
        logits_t = jnp.take_along_axis(out_t_full, idx, axis=1)
        ce_s = jax.nn.logsumexp(logits_s, axis=-1) - logits_s[:, 0]
        ce_t = jax.nn.logsumexp(logits_t, axis=-1) - logits_t[:, 0]
        return jnp.mean(ce_s + ce_t)

    return _loss_via_streaming(f_s, f_t, idx, memory_v1, memory_v2, inv_t,
                               k_tile=k_tile, b_tile=b_tile, kind=kind,
                               vmem_limit=vmem_limit)


def _reference_loss(f_s, f_t, idx, memory_v1, memory_v2, nce_t):
    w_t = memory_v1[idx]
    w_s = memory_v2[idx]
    logits_s = jnp.einsum('bkd,bd->bk', w_s, f_s) / nce_t
    logits_t = jnp.einsum('bkd,bd->bk', w_t, f_t) / nce_t

    def ce(l):
        return jnp.mean(jax.nn.logsumexp(l, axis=-1) - l[:, 0])

    return ce(logits_s) + ce(logits_t)


if __name__ == "__main__":
    # Small, module-consistent shapes (opt.feat_dim, n_data, opt.nce_k, opt.nce_t),
    # chosen so both paths, the K-tail mask and the batch-tail padding all run.
    bsz, feat_dim, n_data, nce_k, nce_t = 12, 32, 384, 40, 0.07

    key = jax.random.PRNGKey(0)
    k_fs, k_ft, k_m1, k_m2, k_idx = jax.random.split(key, 5)

    f_s = jax.random.normal(k_fs, (bsz, feat_dim), dtype=jnp.float32)
    f_t = jax.random.normal(k_ft, (bsz, feat_dim), dtype=jnp.float32)

    # Deterministic memory-bank init matching NCESoftmax.__init__:
    #   stdv = 1/sqrt(feat_dim/3); memory ~ U(-stdv, stdv), shape [n_data, feat_dim]
    # (banks may also be stored in bf16; both kernels accept any bank dtype.)
    stdv = 1.0 / math.sqrt(feat_dim / 3.0)
    memory_v1 = jax.random.uniform(k_m1, (n_data, feat_dim), jnp.float32, -stdv, stdv)
    memory_v2 = jax.random.uniform(k_m2, (n_data, feat_dim), jnp.float32, -stdv, stdv)

    # contrast_idx: [bsz, K+1] indices into the memory bank; column 0 holds the
    # positive-sample index y (matches idx.select(1,0).copy_(y) in the torch code).
    y = jnp.arange(bsz, dtype=jnp.int32)
    idx = jax.random.randint(k_idx, (bsz, nce_k + 1), 0, n_data, dtype=jnp.int32)
    idx = idx.at[:, 0].set(y)

    ref = _reference_loss(f_s, f_t, idx, memory_v1, memory_v2, nce_t)

    # Path A: bank-matmul + logit-gather (bsz*(K+1)=492 >= n_data=384); n_tile=128 so
    # the 1-D grid actually streams (3 steps).  MXU default precision -> looser tol.
    loss_mm = jax.block_until_ready(
        nce_softmax_loss(f_s, f_t, idx, memory_v1, memory_v2, nce_t, n_tile=128))
    assert jnp.isfinite(loss_mm), "non-finite loss (matmul path)"
    assert jnp.allclose(loss_mm, ref, rtol=2e-2, atol=2e-2), (loss_mm, ref)

    # Path B: streaming online-LSE fallback (forced), small tiles so the 2-D grid,
    # the gated K-tail mask and the batch-tail padding are all exercised (nb=2, nk=3).
    loss_st = jax.block_until_ready(
        nce_softmax_loss(f_s, f_t, idx, memory_v1, memory_v2, nce_t,
                         k_tile=16, b_tile=8, force_streaming=True))
    assert jnp.isfinite(loss_st), "non-finite loss (streaming path)"
    assert jnp.allclose(loss_st, ref, rtol=1e-3, atol=1e-3), (loss_st, ref)

    print("KERNEL_OK")
</pallas_src>

<mosaic_0001>
module attributes {stable_mosaic.version = 11 : i64} {
  func.func @_bank_logits_kernel(%arg0: i32, %arg1: memref<12x32xf32, #tpu.memory_space<vmem>>, %arg2: memref<12x32xf32, #tpu.memory_space<vmem>>, %arg3: memref<128x32xf32, #tpu.memory_space<vmem>>, %arg4: memref<128x32xf32, #tpu.memory_space<vmem>>, %arg5: memref<12x128xf32, #tpu.memory_space<vmem>>, %arg6: memref<12x128xf32, #tpu.memory_space<vmem>>) attributes {dimension_semantics = [#tpu.dimension_semantics<parallel>], iteration_bounds = array<i64: 3>, scalar_prefetch = 0 : i64, scratch_operands = 0 : i64, tpu.core_type = #tpu.core_type<tc>, window_params = [{pipeline_mode = #tpu.pipeline_mode<synchronous>, transform_indices = @transform_0, window_bounds = array<i64: 12, 32>}, {pipeline_mode = #tpu.pipeline_mode<synchronous>, transform_indices = @transform_1, window_bounds = array<i64: 12, 32>}, {transform_indices = @transform_2, window_bounds = array<i64: 128, 32>}, {transform_indices = @transform_3, window_bounds = array<i64: 128, 32>}, {transform_indices = @transform_4, window_bounds = array<i64: 12, 128>}, {transform_indices = @transform_5, window_bounds = array<i64: 12, 128>}]} {
    %c0 = arith.constant 0 : index
    %c0_0 = arith.constant 0 : index
    %0 = vector.load %arg1[%c0, %c0_0] : memref<12x32xf32, #tpu.memory_space<vmem>>, vector<12x32xf32>
    %cst = arith.constant 14.2857141 : f32
    %1 = vector.broadcast %cst : f32 to vector<12x32xf32>
    %2 = arith.mulf %0, %1 : vector<12x32xf32>
    %c0_1 = arith.constant 0 : index
    %c0_2 = arith.constant 0 : index
    %3 = vector.load %arg2[%c0_1, %c0_2] : memref<12x32xf32, #tpu.memory_space<vmem>>, vector<12x32xf32>
    %cst_3 = arith.constant 14.2857141 : f32
    %4 = vector.broadcast %cst_3 : f32 to vector<12x32xf32>
    %5 = arith.mulf %3, %4 : vector<12x32xf32>
    %c0_4 = arith.constant 0 : index
    %c0_5 = arith.constant 0 : index
    %6 = vector.load %arg4[%c0_4, %c0_5] : memref<128x32xf32, #tpu.memory_space<vmem>>, vector<128x32xf32>
    %cst_6 = arith.constant dense<0.000000e+00> : vector<12x128xf32>
    %7 = tpu.matmul %2, %6, %cst_6 {dimension_numbers = #tpu.dot_dimension_numbers<[1], [1], [0], [0], [0, 0, 1, 0], [], []>} : vector<12x32xf32>, vector<128x32xf32>, vector<12x128xf32> -> vector<12x128xf32>
    %c0_7 = arith.constant 0 : index
    %c0_8 = arith.constant 0 : index
    %8 = vector.load %arg5[%c0_7, %c0_8] : memref<12x128xf32, #tpu.memory_space<vmem>>, vector<12x128xf32>
    tpu.vector_store %arg5[%c0_7, %c0_8], %7 {strides = array<i32>} : memref<12x128xf32, #tpu.memory_space<vmem>>, vector<12x128xf32>,
    %c0_9 = arith.constant 0 : index
    %c0_10 = arith.constant 0 : index
    %9 = vector.load %arg3[%c0_9, %c0_10] : memref<128x32xf32, #tpu.memory_space<vmem>>, vector<128x32xf32>
    %cst_11 = arith.constant dense<0.000000e+00> : vector<12x128xf32>
    %10 = tpu.matmul %5, %9, %cst_11 {dimension_numbers = #tpu.dot_dimension_numbers<[1], [1], [0], [0], [0, 0, 1, 0], [], []>} : vector<12x32xf32>, vector<128x32xf32>, vector<12x128xf32> -> vector<12x128xf32>
    %c0_12 = arith.constant 0 : index
    %c0_13 = arith.constant 0 : index
    %11 = vector.load %arg6[%c0_12, %c0_13] : memref<12x128xf32, #tpu.memory_space<vmem>>, vector<12x128xf32>
    tpu.vector_store %arg6[%c0_12, %c0_13], %10 {strides = array<i32>} : memref<12x128xf32, #tpu.memory_space<vmem>>, vector<12x128xf32>,
    return
  }
  func.func @transform_0(%arg0: i32) -> (i32, i32) {
    %c0_i32 = arith.constant 0 : i32
    %c0_i32_0 = arith.constant 0 : i32
    %c0_i32_1 = arith.constant 0 : i32
    return %c0_i32, %c0_i32_0 : i32, i32
  }
  func.func @transform_1(%arg0: i32) -> (i32, i32) {
    %c0_i32 = arith.constant 0 : i32
    %c0_i32_0 = arith.constant 0 : i32
    %c0_i32_1 = arith.constant 0 : i32
    return %c0_i32, %c0_i32_0 : i32, i32
  }
  func.func @transform_2(%arg0: i32) -> (i32, i32) {
    %c0_i32 = arith.constant 0 : i32
    %c0_i32_0 = arith.constant 0 : i32
    return %arg0, %c0_i32 : i32, i32
  }
  func.func @transform_3(%arg0: i32) -> (i32, i32) {
    %c0_i32 = arith.constant 0 : i32
    %c0_i32_0 = arith.constant 0 : i32
    return %arg0, %c0_i32 : i32, i32
  }
  func.func @transform_4(%arg0: i32) -> (i32, i32) {
    %c0_i32 = arith.constant 0 : i32
    %c0_i32_0 = arith.constant 0 : i32
    return %c0_i32, %arg0 : i32, i32
  }
  func.func @transform_5(%arg0: i32) -> (i32, i32) {
    %c0_i32 = arith.constant 0 : i32
    %c0_i32_0 = arith.constant 0 : i32
    return %c0_i32, %arg0 : i32, i32
  }
}

</mosaic_0001>

<llo_original>
// kernel: tpu_custom_call.1
$region0: #{tpu_custom_call.1}
  #allocation0 [shape = 'u32[]', space=smem, size = 0x4, offset = 0x4, fixed_abs, tag = 'smem constant byte address 0x4 - core index']
  #allocation1 [shape = 'u32[72,128]{1,0:T(1,128)}', space=vmem, size = 0x9000, scoped, tag = 'internal scratch']
  %s0 = inlined_call_operand.vmem [shape: f32[12,32], index: 0, kind: input, shape index: {}]
  %s1 = inlined_call_operand.vmem [shape: f32[12,32], index: 1, kind: input, shape index: {}]
  %s2 = inlined_call_operand.vmem [shape: f32[384,32], index: 2, kind: input, shape index: {}]
  %s3 = inlined_call_operand.vmem [shape: f32[384,32], index: 3, kind: input, shape index: {}]
  %s4 = inlined_call_operand.hbm [shape: f32[12,384], index: 4, kind: output, shape index: {0}]
  %s5 = inlined_call_operand.hbm [shape: f32[12,384], index: 5, kind: output, shape index: {1}]
  %6 = xla_tuple %s4, %s5
  %s7 = sld [smem:[#allocation0]]
  $region57: #{tpu_custom_call.1} parent=0
    _
  %s9 = ssub.s32 1, %s7
  %s10 = scalar_select 0, %s9, %s7
  $region1: #{tpu_custom_call.1} parent=0
    #allocation2 [shape = 'u8[16384]{0}', space=vmem, size = 0x4000, scoped, tag = 'output window, operand 0']
    #allocation3 [shape = 's32[2]{0}', space=sflag, size = 0x8, scoped, tag = 'scoped memory for tpu_custom_call.1']
    #allocation4 [shape = 'u8[16384]{0}', space=vmem, size = 0x4000, scoped, tag = 'output window, operand 1']
    #allocation5 [shape = 's32[2]{0}', space=sflag, size = 0x8, scoped, tag = 'scoped memory for tpu_custom_call.1']
    %11 = vsyncpa [#allocation3], 0
    %s12 = scalar_lea.sflag [#allocation3], 1
    %13 = vsyncpa %s12, 0
    %14 = vsyncpa [#allocation5], 0
    %s15 = scalar_lea.sflag [#allocation5], 1
    %16 = vsyncpa %s15, 0
    loop: start=0, step=1, limit=5
    $region2: #{tpu_custom_call.1} parent=1 // loop_pre_header
      _
    $region3: #{tpu_custom_call.1} parent=1 // loop_header
      %s18 = sphi 0, %s22
      %p19 = scmp.ge.s32.totalorder %s18, 5
      %s26 = sphi 0, %s26
      %s28 = sphi 0, %s26
      %s29 = sphi 0, %s28
      %s43 = sphi 0, %s29
      %s47 = sphi 0, %s47
      %s49 = sphi 0, %s47
      %s50 = sphi 0, %s49
      %s64 = sphi 0, %s50
      %s70 = sphi 0, %s72
      %s73 = sphi 0, %s70
      %s74 = sphi 0, %s73
      %s90 = sphi 0, %s74
      %s96 = sphi 0, %s98
      %s99 = sphi 0, %s96
      %s100 = sphi 0, %s99
      %s116 = sphi 0, %s100
      %s122 = sphi 0, %s124
      %s125 = sphi 0, %s122
      %s126 = sphi 0, %s125
      %s142 = sphi 0, %s126
      %s148 = sphi 0, %s150
      %s151 = sphi 0, %s148
      %s152 = sphi 0, %s151
      %s168 = sphi 0, %s152
    $region4: #{tpu_custom_call.1} parent=1 // loop_header_branch
      %21 = sbr.rel (%p19) target = $region8
    $region5: #{tpu_custom_call.1} parent=1 // loop_body
      %s23 = ssub.s32 %s18, 1
      %s24 = ssub.s32 %s18, 2
      %s25 = sadd.s32 %s18, 1
      %s27 = sadd.s32 %s26, 1
      %p30 = scmp.eq.s32.totalorder %s18, 2
      %p31 = scmp.ne.s32.totalorder %s26, %s28
      %p32 = scmp.eq.s32.totalorder %s18, 0
      %p33 = por %p31, %p32
      %p34 = scmp.ne.s32.totalorder %s26, %s28
      %p35 = scmp.eq.s32.totalorder %s23, 2
      %p36 = por %p34, %p35
      %p37 = scmp.ne.s32.totalorder %s28, %s29
      %p38 = scmp.eq.s32.totalorder %s23, 0
      %p39 = por %p37, %p38
      %p40 = scmp.ne.s32.totalorder %s28, %s29
      %p41 = scmp.eq.s32.totalorder %s24, 2
      %p42 = por %p40, %p41
      %p44 = scmp.ne.s32.totalorder %s29, %s43
      %p45 = scmp.eq.s32.totalorder %s24, 0
      %p46 = por %p44, %p45
      %s48 = sadd.s32 %s47, 1
      %p51 = scmp.eq.s32.totalorder %s18, 2
      %p52 = scmp.ne.s32.totalorder %s47, %s49
      %p53 = scmp.eq.s32.totalorder %s18, 0
      %p54 = por %p52, %p53
      %p55 = scmp.ne.s32.totalorder %s47, %s49
      %p56 = scmp.eq.s32.totalorder %s23, 2
      %p57 = por %p55, %p56
      %p58 = scmp.ne.s32.totalorder %s49, %s50
      %p59 = scmp.eq.s32.totalorder %s23, 0
      %p60 = por %p58, %p59
      %p61 = scmp.ne.s32.totalorder %s49, %s50
      %p62 = scmp.eq.s32.totalorder %s24, 2
      %p63 = por %p61, %p62
      %p65 = scmp.ne.s32.totalorder %s50, %s64
      %p66 = scmp.eq.s32.totalorder %s24, 0
      %p67 = por %p65, %p66
      %s68 = ssub.s32 %s18, %s25
      %p69 = scmp.eq.s32.totalorder %s68, 0
      %s71 = sadd.s32 %s70, 1
      %s72 = scalar_select %p69, %s70, %s71
      %p75 = pneg %p69
      %p76 = scmp.eq.s32.totalorder %s18, 2
      %p77 = por %p75, %p76
      %p78 = scmp.ne.s32.totalorder %s70, %s73
      %p79 = scmp.eq.s32.totalorder %s18, 0
      %p80 = por %p78, %p79
      %p81 = scmp.ne.s32.totalorder %s70, %s73
      %p82 = scmp.eq.s32.totalorder %s23, 2
      %p83 = por %p81, %p82
      %p84 = scmp.ne.s32.totalorder %s73, %s74
      %p85 = scmp.eq.s32.totalorder %s23, 0
      %p86 = por %p84, %p85
      %p87 = scmp.ne.s32.totalorder %s73, %s74
      %p88 = scmp.eq.s32.totalorder %s24, 2
      %p89 = por %p87, %p88
      %p91 = scmp.ne.s32.totalorder %s74, %s90
      %p92 = scmp.eq.s32.totalorder %s24, 0
      %p93 = por %p91, %p92
      %s94 = ssub.s32 %s18, %s25
      %p95 = scmp.eq.s32.totalorder %s94, 0
      %s97 = sadd.s32 %s96, 1
      %s98 = scalar_select %p95, %s96, %s97
      %p101 = pneg %p95
      %p102 = scmp.eq.s32.totalorder %s18, 2
      %p103 = por %p101, %p102
      %p104 = scmp.ne.s32.totalorder %s96, %s99
      %p105 = scmp.eq.s32.totalorder %s18, 0
      %p106 = por %p104, %p105
      %p107 = scmp.ne.s32.totalorder %s96, %s99
      %p108 = scmp.eq.s32.totalorder %s23, 2
      %p109 = por %p107, %p108
      %p110 = scmp.ne.s32.totalorder %s99, %s100
      %p111 = scmp.eq.s32.totalorder %s23, 0
      %p112 = por %p110, %p111
      %p113 = scmp.ne.s32.totalorder %s99, %s100
      %p114 = scmp.eq.s32.totalorder %s24, 2
      %p115 = por %p113, %p114
      %p117 = scmp.ne.s32.totalorder %s100, %s116
      %p118 = scmp.eq.s32.totalorder %s24, 0
      %p119 = por %p117, %p118
      %s120 = ssub.s32 %s18, %s25
      %p121 = scmp.eq.s32.totalorder %s120, 0
      %s123 = sadd.s32 %s122, 1
      %s124 = scalar_select %p121, %s122, %s123
      %p127 = pneg %p121
      %p128 = scmp.eq.s32.totalorder %s18, 2
      %p129 = por %p127, %p128
      %p130 = scmp.ne.s32.totalorder %s122, %s125
      %p131 = scmp.eq.s32.totalorder %s18, 0
      %p132 = por %p130, %p131
      %p133 = scmp.ne.s32.totalorder %s122, %s125
      %p134 = scmp.eq.s32.totalorder %s23, 2
      %p135 = por %p133, %p134
      %p136 = scmp.ne.s32.totalorder %s125, %s126
      %p137 = scmp.eq.s32.totalorder %s23, 0
      %p138 = por %p136, %p137
      %p139 = scmp.ne.s32.totalorder %s125, %s126
      %p140 = scmp.eq.s32.totalorder %s24, 2
      %p141 = por %p139, %p140
      %p143 = scmp.ne.s32.totalorder %s126, %s142
      %p144 = scmp.eq.s32.totalorder %s24, 0
      %p145 = por %p143, %p144
      %s146 = ssub.s32 %s18, %s25
      %p147 = scmp.eq.s32.totalorder %s146, 0
      %s149 = sadd.s32 %s148, 1
      %s150 = scalar_select %p147, %s148, %s149
      %p153 = pneg %p147
      %p154 = scmp.eq.s32.totalorder %s18, 2
      %p155 = por %p153, %p154
      %p156 = scmp.ne.s32.totalorder %s148, %s151
      %p157 = scmp.eq.s32.totalorder %s18, 0
      %p158 = por %p156, %p157
      %p159 = scmp.ne.s32.totalorder %s148, %s151
      %p160 = scmp.eq.s32.totalorder %s23, 2
      %p161 = por %p159, %p160
      %p162 = scmp.ne.s32.totalorder %s151, %s152
      %p163 = scmp.eq.s32.totalorder %s23, 0
      %p164 = por %p162, %p163
      %p165 = scmp.ne.s32.totalorder %s151, %s152
      %p166 = scmp.eq.s32.totalorder %s24, 2
      %p167 = por %p165, %p166
      %p169 = scmp.ne.s32.totalorder %s152, %s168
      %p170 = scmp.eq.s32.totalorder %s24, 0
      %p171 = por %p169, %p170
      %p172 = scmp.le.s32.totalorder 1, %s18
      %p173 = scmp.lt.s32.totalorder %s18, 4
      %p174 = pnand %p172, %p173
      %p175 = pneg %p174
      // Predicated region
      $region9: #{tpu_custom_call.1} parent=5 // pred_check
        _
      $region10: #{tpu_custom_call.1} parent=5 // pred_check_branch
        %177 = sbr.rel (%p174) target = $region12
      $region11: #{tpu_custom_call.1} parent=5 // pred_region
        %s178 = ssub.s32 %s18, 1
        // Predicated region
        $region13: #{tpu_custom_call.1} parent=11 // pred_check
          %p179 = pneg %p39
        $region14: #{tpu_custom_call.1} parent=11 // pred_check_branch
          %181 = sbr.rel (%p179) target = $region16
        $region15: #{tpu_custom_call.1} parent=11 // pred_region
          _
        $region16: #{tpu_custom_call.1} parent=11 // pred_fallthru
          _
        // Predicated region
        $region17: #{tpu_custom_call.1} parent=11 // pred_check
          %p182 = pneg %p60
        $region18: #{tpu_custom_call.1} parent=11 // pred_check_branch
          %184 = sbr.rel (%p182) target = $region20
        $region19: #{tpu_custom_call.1} parent=11 // pred_region
          _
        $region20: #{tpu_custom_call.1} parent=11 // pred_fallthru
          _
      $region12: #{tpu_custom_call.1} parent=5 // pred_fallthru
        _
      %p185 = scmp.lt.s32.totalorder %s18, 3
      // Predicated region
      $region21: #{tpu_custom_call.1} parent=5 // pred_check
        %p186 = pneg %p185
      $region22: #{tpu_custom_call.1} parent=5 // pred_check_branch
        %188 = sbr.rel (%p186) target = $region24
      $region23: #{tpu_custom_call.1} parent=5 // pred_region
        // Predicated region
        $region25: #{tpu_custom_call.1} parent=23 // pred_check
          %p189 = pneg %p80
        $region26: #{tpu_custom_call.1} parent=23 // pred_check_branch
          %191 = sbr.rel (%p189) target = $region28
        $region27: #{tpu_custom_call.1} parent=23 // pred_region
          %s192 = smul.u32 16, %s18
          %p193 = scmp.lt.s32.totalorder %s192, 47
          %s194 = scalar_select %p193, %s192, 47
          %s195 = smul.addr %s194, 8
          %s196 = scalar_lea.vmem %s2, %s195
          %s197 = smul.u32 16, %s18
        $region28: #{tpu_custom_call.1} parent=23 // pred_fallthru
          _
        // Predicated region
        $region29: #{tpu_custom_call.1} parent=23 // pred_check
          %p198 = pneg %p106
        $region30: #{tpu_custom_call.1} parent=23 // pred_check_branch
          %200 = sbr.rel (%p198) target = $region32
        $region31: #{tpu_custom_call.1} parent=23 // pred_region
          %s201 = smul.u32 16, %s18
          %p202 = scmp.lt.s32.totalorder %s201, 47
          %s203 = scalar_select %p202, %s201, 47
          %s204 = smul.addr %s203, 8
          %s205 = scalar_lea.vmem %s3, %s204
          %s206 = smul.u32 16, %s18
        $region32: #{tpu_custom_call.1} parent=23 // pred_fallthru
          _
      $region24: #{tpu_custom_call.1} parent=5 // pred_fallthru
        _
      %p207 = scmp.le.s32.totalorder 1, %s18
      %p208 = scmp.lt.s32.totalorder %s18, 4
      %p209 = pnand %p207, %p208
      %p210 = pneg %p209
      // Predicated region
      $region33: #{tpu_custom_call.1} parent=5 // pred_check
        _
      $region34: #{tpu_custom_call.1} parent=5 // pred_check_branch
        %212 = sbr.rel (%p209) target = $region36
      $region35: #{tpu_custom_call.1} parent=5 // pred_region
        %s213 = ssub.s32 %s18, 1
        %p214 = pneg %p39
        %p215 = pneg %p36
        %p216 = pneg %p60
        %p217 = pneg %p57
        %s218 = smul.u32 16, %s23
        %p219 = scmp.lt.s32.totalorder %s218, 47
        %s220 = scalar_select %p219, %s218, 47
        %s221 = smul.addr %s220, 8
        %s222 = scalar_lea.vmem %s2, %s221
        %p223 = pneg %p86
        %p224 = pneg %p83
        %s225 = smul.u32 16, %s23
        %p226 = scmp.lt.s32.totalorder %s225, 47
        %s227 = scalar_select %p226, %s225, 47
        %s228 = smul.addr %s227, 8
        %s229 = scalar_lea.vmem %s3, %s228
        %p230 = pneg %p112
        %p231 = pneg %p109
        %p232 = pneg %p138
        %p233 = pneg %p135
        %s234 = sand.u32 %s125, 1
        %s235 = scalar_lea.sflag [#allocation3], %s234
        %s236 = sand.u32 %s125, 1
        %s237 = smul.addr %s236, 16
        %s238 = scalar_lea.vmem [#allocation2], %s237
        %p239 = pneg %p164
        %p240 = pneg %p161
        %s241 = sand.u32 %s151, 1
        %s242 = scalar_lea.sflag [#allocation5], %s241
        %s243 = sand.u32 %s151, 1
        %s244 = smul.addr %s243, 16
        %s245 = scalar_lea.vmem [#allocation4], %s244
        %s246 = smul.u32 16, %s23
        %p247 = scmp.lt.s32.totalorder %s246, 47
        %s248 = scalar_select %p247, %s246, 47
        %s249 = smul.addr %s248, 8
        %s250 = scalar_lea.vmem %s2, %s249
        %s251 = smul.u32 16, %s23
        %s252 = smul.u32 16, %s23
        %p253 = scmp.lt.s32.totalorder %s252, 47
        %s254 = scalar_select %p253, %s252, 47
        %s255 = smul.addr %s254, 8
        %s256 = scalar_lea.vmem %s3, %s255
        %s257 = smul.u32 16, %s23
        %v258 = vld [vmem:[%s0] sm:$0xff]
        %v259 = vld [vmem:[%s0 + $0x8] sm:$0xf]
        %v260 = vmul.f32 %v258, 14.285714
        %v261 = vmul.f32 %v259, 14.285714
        %v262 = vld [vmem:[%s1] sm:$0xff]
        %v263 = vld [vmem:[%s1 + $0x8] sm:$0xf]
        %v264 = vmul.f32 %v262, 14.285714
        %v265 = vmul.f32 %v263, 14.285714
        %v266 = vld [vmem:[%s256] sm:$0xff]
        %v267 = vld [vmem:[%s256 + $0x8] sm:$0xff]
        %v268 = vld [vmem:[%s256 + $0x10] sm:$0xff]
        %v269 = vld [vmem:[%s256 + $0x18] sm:$0xff]
        %v270 = vld [vmem:[%s256 + $0x20] sm:$0xff]
        %v271 = vld [vmem:[%s256 + $0x28] sm:$0xff]
        %v272 = vld [vmem:[%s256 + $0x30] sm:$0xff]
        %v273 = vld [vmem:[%s256 + $0x38] sm:$0xff]
        %v274 = vld [vmem:[%s256 + $0x40] sm:$0xff]
        %v275 = vld [vmem:[%s256 + $0x48] sm:$0xff]
        %v276 = vld [vmem:[%s256 + $0x50] sm:$0xff]
        %v277 = vld [vmem:[%s256 + $0x58] sm:$0xff]
        %v278 = vld [vmem:[%s256 + $0x60] sm:$0xff]
        %v279 = vld [vmem:[%s256 + $0x68] sm:$0xff]
        %v280 = vld [vmem:[%s256 + $0x70] sm:$0xff]
        %v281 = vld [vmem:[%s256 + $0x78] sm:$0xff]
        %vm282 = vcmask 261120
        %v284 = vsel %vm282, %v260, 0
        %v287 = vsel %vm282, %v261, 0
        %v290 = vsel %vm282, %v266, 0
        %v293 = vsel %vm282, %v267, 0
        %v296 = vsel %vm282, %v268, 0
        %v299 = vsel %vm282, %v269, 0
        %v302 = vsel %vm282, %v270, 0
        %v305 = vsel %vm282, %v271, 0
        %v308 = vsel %vm282, %v272, 0
        %v311 = vsel %vm282, %v273, 0
        %v314 = vsel %vm282, %v274, 0
        %v317 = vsel %vm282, %v275, 0
        %v320 = vsel %vm282, %v276, 0
        %v323 = vsel %vm282, %v277, 0
        %v326 = vsel %vm282, %v278, 0
        %v329 = vsel %vm282, %v279, 0
        %v332 = vsel %vm282, %v280, 0
        %v335 = vsel %vm282, %v281, 0
        %337 = vmatpush.xpose.msra.mxu0 %v335
        %338 = vmatpush.xpose.msra.mxu0 %v332
        %339 = vmatpush.xpose.msra.mxu0 %v329
        %340 = vmatpush.xpose.msra.mxu0 %v326
        %341 = vmatpush.xpose.msra.mxu0 %v323
        %342 = vmatpush.xpose.msra.mxu0 %v320
        %343 = vmatpush.xpose.msra.mxu0 %v317
        %344 = vmatpush.xpose.msra.mxu0 %v314
        %345 = vmatpush.xpose.msra.mxu0 %v311
        %346 = vmatpush.xpose.msra.mxu0 %v308
        %347 = vmatpush.xpose.msra.mxu0 %v305
        %348 = vmatpush.xpose.msra.mxu0 %v302
        %349 = vmatpush.xpose.msra.mxu0 %v299
        %350 = vmatpush.xpose.msra.mxu0 %v296
        %351 = vmatpush.xpose.msra.mxu0 %v293
        %352 = vmatpush.xpose.msra.mxu0 %v290
        %353 = vmatmul.f32.gmra.mxu0 %v284
        %v354 = vpop.f32.mrf.mxu0
        %v355 = vadd.f32 0.0, %v354
        %356 = vmatmul.f32.gmra.mxu0 %v287
        %v357 = vpop.f32.mrf.mxu0
        %v358 = vadd.f32 0.0, %v357
        %359 = vdwg.mxu0
        %360 = vst [vmem:[%s238] sm:$0xff] %v355
        %361 = vst [vmem:[%s238 + $0x8] sm:$0xf] %v358
        %v362 = vld [vmem:[%s250] sm:$0xff]
        %v363 = vld [vmem:[%s250 + $0x8] sm:$0xff]
        %v364 = vld [vmem:[%s250 + $0x10] sm:$0xff]
        %v365 = vld [vmem:[%s250 + $0x18] sm:$0xff]
        %v366 = vld [vmem:[%s250 + $0x20] sm:$0xff]
        %v367 = vld [vmem:[%s250 + $0x28] sm:$0xff]
        %v368 = vld [vmem:[%s250 + $0x30] sm:$0xff]
        %v369 = vld [vmem:[%s250 + $0x38] sm:$0xff]
        %v370 = vld [vmem:[%s250 + $0x40] sm:$0xff]
        %v371 = vld [vmem:[%s250 + $0x48] sm:$0xff]
        %v372 = vld [vmem:[%s250 + $0x50] sm:$0xff]
        %v373 = vld [vmem:[%s250 + $0x58] sm:$0xff]
        %v374 = vld [vmem:[%s250 + $0x60] sm:$0xff]
        %v375 = vld [vmem:[%s250 + $0x68] sm:$0xff]
        %v376 = vld [vmem:[%s250 + $0x70] sm:$0xff]
        %v377 = vld [vmem:[%s250 + $0x78] sm:$0xff]
        %v379 = vsel %vm282, %v264, 0
        %v382 = vsel %vm282, %v265, 0
        %v385 = vsel %vm282, %v362, 0
        %v388 = vsel %vm282, %v363, 0
        %v391 = vsel %vm282, %v364, 0
        %v394 = vsel %vm282, %v365, 0
        %v397 = vsel %vm282, %v366, 0
        %v400 = vsel %vm282, %v367, 0
        %v403 = vsel %vm282, %v368, 0
        %v406 = vsel %vm282, %v369, 0
        %v409 = vsel %vm282, %v370, 0
        %v412 = vsel %vm282, %v371, 0
        %v415 = vsel %vm282, %v372, 0
        %v418 = vsel %vm282, %v373, 0
        %v421 = vsel %vm282, %v374, 0
        %v424 = vsel %vm282, %v375, 0
        %v427 = vsel %vm282, %v376, 0
        %v430 = vsel %vm282, %v377, 0
        %432 = vmatpush.xpose.msra.mxu0 %v430
        %433 = vmatpush.xpose.msra.mxu0 %v427
        %434 = vmatpush.xpose.msra.mxu0 %v424
        %435 = vmatpush.xpose.msra.mxu0 %v421
        %436 = vmatpush.xpose.msra.mxu0 %v418
        %437 = vmatpush.xpose.msra.mxu0 %v415
        %438 = vmatpush.xpose.msra.mxu0 %v412
        %439 = vmatpush.xpose.msra.mxu0 %v409
        %440 = vmatpush.xpose.msra.mxu0 %v406
        %441 = vmatpush.xpose.msra.mxu0 %v403
        %442 = vmatpush.xpose.msra.mxu0 %v400
        %443 = vmatpush.xpose.msra.mxu0 %v397
        %444 = vmatpush.xpose.msra.mxu0 %v394
        %445 = vmatpush.xpose.msra.mxu0 %v391
        %446 = vmatpush.xpose.msra.mxu0 %v388
        %447 = vmatpush.xpose.msra.mxu0 %v385
        %448 = vmatmul.f32.gmra.mxu0 %v379
        %v449 = vpop.f32.mrf.mxu0
        %v450 = vadd.f32 0.0, %v449
        %451 = vmatmul.f32.gmra.mxu0 %v382
        %v452 = vpop.f32.mrf.mxu0
        %v453 = vadd.f32 0.0, %v452
        %454 = vdwg.mxu0
        %455 = vst [vmem:[%s245] sm:$0xff] %v450
        %456 = vst [vmem:[%s245 + $0x8] sm:$0xf] %v453
        %s457 = sand.u32 %s125, 1
        %s458 = scalar_lea.sflag [#allocation3], %s457
        %s459 = sand.u32 %s125, 1
        %s460 = smul.addr %s459, 16
        %s461 = scalar_lea.vmem [#allocation2], %s460
        %s462 = sand.u32 %s151, 1
        %s463 = scalar_lea.sflag [#allocation5], %s462
        %s464 = sand.u32 %s151, 1
        %s465 = smul.addr %s464, 16
        %s466 = scalar_lea.vmem [#allocation4], %s465
        // Predicated region
        $region37: #{tpu_custom_call.1} parent=35 // pred_check
          %p467 = pneg %p135
        $region38: #{tpu_custom_call.1} parent=35 // pred_check_branch
          %469 = sbr.rel (%p467) target = $region40
        $region39: #{tpu_custom_call.1} parent=35 // pred_region
          %471 = vsyncadd %s458, 0
          %s472 = smul.addr %s23, 8
          %s473 = scalar_lea.hbm %s4, %s472
          %s474 = sshll.u32 %s461, 4
          %s475 = int_to_ptr.vmem [resolvable:$true] %s474
          %s476 = sshll.u32 %s473, 4
          %s477 = int_to_ptr.hbm [resolvable:$true] %s476
          %482 = dma.vmem_to_hbm [thread:$0]  %s475, 256, %s477, %s458, 128, 384, 8
        $region40: #{tpu_custom_call.1} parent=35 // pred_fallthru
          _
        // Predicated region
        $region41: #{tpu_custom_call.1} parent=35 // pred_check
          %p483 = pneg %p161
        $region42: #{tpu_custom_call.1} parent=35 // pred_check_branch
          %485 = sbr.rel (%p483) target = $region44
        $region43: #{tpu_custom_call.1} parent=35 // pred_region
          %487 = vsyncadd %s463, 0
          %s488 = smul.addr %s23, 8
          %s489 = scalar_lea.hbm %s5, %s488
          %s490 = sshll.u32 %s466, 4
          %s491 = int_to_ptr.vmem [resolvable:$true] %s490
          %s492 = sshll.u32 %s489, 4
          %s493 = int_to_ptr.hbm [resolvable:$true] %s492
          %498 = dma.vmem_to_hbm [thread:$0]  %s491, 256, %s493, %s463, 128, 384, 8
        $region44: #{tpu_custom_call.1} parent=35 // pred_fallthru
          _
      $region36: #{tpu_custom_call.1} parent=5 // pred_fallthru
        _
      %p499 = scmp.le.s32.totalorder 2, %s18
      // Predicated region
      $region45: #{tpu_custom_call.1} parent=5 // pred_check
        %p500 = pneg %p499
      $region46: #{tpu_custom_call.1} parent=5 // pred_check_branch
        %502 = sbr.rel (%p500) target = $region48
      $region47: #{tpu_custom_call.1} parent=5 // pred_region
        %s503 = ssub.s32 %s18, 2
        // Predicated region
        $region49: #{tpu_custom_call.1} parent=47 // pred_check
          %p504 = pneg %p141
        $region50: #{tpu_custom_call.1} parent=47 // pred_check_branch
          %506 = sbr.rel (%p504) target = $region52
        $region51: #{tpu_custom_call.1} parent=47 // pred_region
          %s507 = sand.u32 %s126, 1
          %s508 = scalar_lea.sflag [#allocation3], %s507
          %s509 = sand.u32 %s126, 1
          %s510 = smul.addr %s509, 16
          %s511 = scalar_lea.vmem [#allocation2], %s510
          %513 = dma.done %s508, 256
        $region52: #{tpu_custom_call.1} parent=47 // pred_fallthru
          _
        // Predicated region
        $region53: #{tpu_custom_call.1} parent=47 // pred_check
          %p514 = pneg %p167
        $region54: #{tpu_custom_call.1} parent=47 // pred_check_branch
          %516 = sbr.rel (%p514) target = $region56
        $region55: #{tpu_custom_call.1} parent=47 // pred_region
          %s517 = sand.u32 %s152, 1
          %s518 = scalar_lea.sflag [#allocation5], %s517
          %s519 = sand.u32 %s152, 1
          %s520 = smul.addr %s519, 16
          %s521 = scalar_lea.vmem [#allocation4], %s520
          %523 = dma.done %s518, 256
        $region56: #{tpu_custom_call.1} parent=47 // pred_fallthru
          _
      $region48: #{tpu_custom_call.1} parent=5 // pred_fallthru
        _
    $region6: #{tpu_custom_call.1} parent=1 // loop_footer
      %s22 = sadd.s32 1, %s18
    $region7: #{tpu_custom_call.1} parent=1 // loop_footer_branch
      %17 = sbr.rel target = $region3
    $region8: #{tpu_custom_call.1} parent=1 // loop_exit
      _
    %524 = vsyncpa [#allocation3], 1
    %s525 = scalar_lea.sflag [#allocation3], 1
    %526 = vsyncpa %s525, 1
    %527 = vsyncpa [#allocation5], 1
    %s528 = scalar_lea.sflag [#allocation5], 1
    %529 = vsyncpa %s528, 1

</llo_original>
